<compile_context>
chip_gen: v7x
topology: tpu7x:2x2x1
jax: 0.10.0
libtpu: 0.0.40
codegen_flags: <defaults>
</compile_context>

<pallas_src>
import functools

import jax
import jax.numpy as jnp
from jax import lax
from jax.experimental import pallas as pl
from jax.experimental.pallas import tpu as pltpu


def _round_up(x, m):
    return ((x + m - 1) // m) * m


def _gru_kernel(gi_ref, whh_ref, bhn_ref, fcw_ref, fcb_ref, out_ref, h_ref,
                *, hidden_pad, t_blk, seq_len):
    """One (batch_tile, time_block) grid step of the GRU recurrence.

    gi_ref  : (t_blk, B_tile, 3*Hp) f32  precomputed x@W_ih + folded biases
    whh_ref : (Hp, 3*Hp)            bf16 hidden->gates weights (gate-padded)
    bhn_ref : (1, Hp)               f32  b_hn (stays inside r * (.) term)
    fcw_ref : (1, Hp)               f32  fc weight row (padded)
    fcb_ref : (1, 1)                f32  fc bias
    out_ref : (B_tile, 1)           f32  score, written at last time block
    h_ref   : (B_tile, Hp)          f32  hidden state carried across time blocks
    """
    Hp = hidden_pad
    t_idx = pl.program_id(1)

    @pl.when(t_idx == 0)
    def _():
        h_ref[...] = jnp.zeros_like(h_ref)

    whh = whh_ref[...]                                        # resident bf16 weights
    bhn = jnp.broadcast_to(bhn_ref[...], h_ref.shape)         # hoisted broadcast
    base_t = t_idx * t_blk
    h0 = h_ref[...]

    def step(i, h):
        gi = gi_ref[i]                                        # (B_tile, 3Hp) f32
        gh = jnp.dot(h.astype(jnp.bfloat16), whh,
                     preferred_element_type=jnp.float32)      # (B_tile, 3Hp) f32 acc
        # PyTorch GRU gate order [r, z, n]; each gate is a lane-aligned Hp slice.
        r = jax.nn.sigmoid(gi[:, 0:Hp] + gh[:, 0:Hp])
        z = jax.nn.sigmoid(gi[:, Hp:2 * Hp] + gh[:, Hp:2 * Hp])
        n = jnp.tanh(gi[:, 2 * Hp:3 * Hp] + r * (gh[:, 2 * Hp:3 * Hp] + bhn))
        h_new = (1.0 - z) * n + z * h
        # Mask padded timesteps (T rounded up to a multiple of t_blk).
        return jnp.where(base_t + i < seq_len, h_new, h)

    h_final = lax.fori_loop(0, t_blk, step, h0, unroll=True)
    h_ref[...] = h_final

    @pl.when(t_idx == pl.num_programs(1) - 1)
    def _():
        # Final FC as a VPU reduction (avoids a degenerate N=1 MXU matmul).
        out_ref[...] = (jnp.sum(h_final * fcw_ref[...], axis=-1, keepdims=True)
                        + fcb_ref[...])


def _pad_gate_cols(w, H, Hp):
    """w: (rows, 3H) -> (rows, 3*Hp); each gate's H columns padded to Hp lanes."""
    rows = w.shape[0]
    w3 = w.reshape(rows, 3, H)
    return jnp.pad(w3, ((0, 0), (0, 0), (0, Hp - H))).reshape(rows, 3 * Hp)


def regression_rnn_forward(tokens, params, *, t_blk=4):
    """tokens: (B, T) int32 token ids. Returns (1, B, 1) float32 scores."""
    B, T = tokens.shape
    H = params["w_hh"].shape[1]

    Hp = _round_up(H, 128)     # per-gate lane width
    Bp = _round_up(B, 8)       # sublane-aligned batch
    Tp = _round_up(T, t_blk)
    B_tile = Bp                # one batch tile here; grid axis stays for v7x scaling

    # ---- parameter prep: pre-transposed, gate-padded, biases folded ----
    w_ih_t = jnp.transpose(params["w_ih"]).astype(jnp.float32)        # (E, 3H)
    w_hh_t = jnp.transpose(params["w_hh"]).astype(jnp.float32)        # (H, 3H)
    w_ih_p = _pad_gate_cols(w_ih_t, H, Hp)                            # (E, 3Hp)
    w_hh_p = jnp.pad(_pad_gate_cols(w_hh_t, H, Hp),
                     ((0, Hp - H), (0, 0)))                           # (Hp, 3Hp)

    b_ih3 = params["b_ih"].reshape(3, H).astype(jnp.float32)
    b_hh3 = params["b_hh"].reshape(3, H).astype(jnp.float32)
    # Fold b_ih (all gates) + b_hh (r, z gates) into the hoisted input GEMM;
    # only b_hn must stay inside the recurrence (inside the r * (.) term).
    fold3 = b_ih3 + jnp.concatenate(
        [b_hh3[:2], jnp.zeros((1, H), jnp.float32)], axis=0)
    b_fold = jnp.pad(fold3, ((0, 0), (0, Hp - H))).reshape(1, 1, 3 * Hp)
    b_hn_p = jnp.pad(b_hh3[2:3], ((0, 0), (0, Hp - H)))               # (1, Hp)

    fc_w_p = jnp.pad(params["fc_w"].astype(jnp.float32),
                     ((0, 0), (0, Hp - H)))                           # (1, Hp)
    fc_b = params["fc_b"].reshape(1, 1).astype(jnp.float32)

    # ---- hoisted input projection: ONE MXU-filling GEMM, output time-major ----
    tokens_p = jnp.pad(tokens, ((0, Bp - B), (0, 0)))
    emb = jnp.take(params["embedding"].astype(jnp.float32),
                   tokens_p, axis=0)                                  # (Bp, T, E)
    gi_all = jnp.einsum("bte,eg->tbg", emb, w_ih_p,
                        preferred_element_type=jnp.float32) + b_fold  # (T, Bp, 3Hp)
    gi_all = jnp.pad(gi_all, ((0, Tp - T), (0, 0), (0, 0)))

    whh_bf16 = w_hh_p.astype(jnp.bfloat16)   # bf16 matmul inputs, f32 accumulation

    kernel = functools.partial(_gru_kernel, hidden_pad=Hp, t_blk=t_blk, seq_len=T)

    grid = (Bp // B_tile, Tp // t_blk)       # (batch "parallel", time "arbitrary")
    out = pl.pallas_call(
        kernel,
        out_shape=jax.ShapeDtypeStruct((Bp, 1), jnp.float32),
        grid=grid,
        in_specs=[
            pl.BlockSpec((t_blk, B_tile, 3 * Hp), lambda b, t: (t, b, 0)),
            pl.BlockSpec((Hp, 3 * Hp), lambda b, t: (0, 0)),
            pl.BlockSpec((1, Hp), lambda b, t: (0, 0)),
            pl.BlockSpec((1, Hp), lambda b, t: (0, 0)),
            pl.BlockSpec((1, 1), lambda b, t: (0, 0)),
        ],
        out_specs=pl.BlockSpec((B_tile, 1), lambda b, t: (b, 0)),
        scratch_shapes=[pltpu.VMEM((B_tile, Hp), jnp.float32)],
        compiler_params=pltpu.CompilerParams(
            dimension_semantics=("parallel", "arbitrary"),
            vmem_limit_bytes=32 * 1024 * 1024,   # safe on v5e/v6e/v7x for these blocks
        ),
    )(gi_all, whh_bf16, b_hn_p, fc_w_p, fc_b)

    # PyTorch: fc(hidden) with hidden shape (1, B, H) -> (1, B, 1)
    return out[:B].reshape(1, B, 1)


def _reference_forward(tokens, params):
    """Pure-JAX f32 reference matching the PyTorch module."""
    B, T = tokens.shape
    H = params["w_hh"].shape[1]
    emb = jnp.take(params["embedding"], tokens, axis=0)   # (B, T, E)
    h = jnp.zeros((B, H), jnp.float32)
    for t in range(T):
        x_t = emb[:, t, :]
        gi = x_t @ params["w_ih"].T + params["b_ih"]
        gh = h @ params["w_hh"].T + params["b_hh"]
        i_r, i_z, i_n = jnp.split(gi, 3, axis=1)
        h_r, h_z, h_n = jnp.split(gh, 3, axis=1)
        r = jax.nn.sigmoid(i_r + h_r)
        z = jax.nn.sigmoid(i_z + h_z)
        n = jnp.tanh(i_n + r * h_n)
        h = (1.0 - z) * n + z * h
    return (h @ params["fc_w"].T + params["fc_b"]).reshape(1, B, 1)


def init_params(key, vocab_size, embed_size, hidden_size):
    """Deterministic synthetic init matching PyTorch parameter shapes."""
    k = jax.random.split(key, 7)
    bound = 1.0 / jnp.sqrt(hidden_size)
    return {
        # nn.Embedding(vocab, embed): N(0, 1)
        "embedding": jax.random.normal(k[0], (vocab_size, embed_size), jnp.float32),
        # nn.GRU(embed, hidden): U(-1/sqrt(H), 1/sqrt(H)), gate order [r, z, n]
        "w_ih": jax.random.uniform(k[1], (3 * hidden_size, embed_size),
                                   jnp.float32, -bound, bound),
        "w_hh": jax.random.uniform(k[2], (3 * hidden_size, hidden_size),
                                   jnp.float32, -bound, bound),
        "b_ih": jax.random.uniform(k[3], (3 * hidden_size,),
                                   jnp.float32, -bound, bound),
        "b_hh": jax.random.uniform(k[4], (3 * hidden_size,),
                                   jnp.float32, -bound, bound),
        # nn.Linear(hidden, 1)
        "fc_w": jax.random.uniform(k[5], (1, hidden_size),
                                   jnp.float32, -bound, bound),
        "fc_b": jax.random.uniform(k[6], (1,),
                                   jnp.float32, -bound, bound),
    }


if __name__ == "__main__":
    VOCAB, EMBED, HIDDEN = 16, 32, 32
    B, T = 2, 8

    key = jax.random.PRNGKey(0)
    pkey, tkey = jax.random.split(key)
    params = init_params(pkey, VOCAB, EMBED, HIDDEN)
    tokens = jax.random.randint(tkey, (B, T), 0, VOCAB, dtype=jnp.int32)

    score = jax.jit(regression_rnn_forward)(tokens, params)
    jax.block_until_ready(score)
    assert score.shape == (1, B, 1)

    ref = _reference_forward(tokens, params)
    assert jnp.allclose(score, ref, rtol=2e-2, atol=2e-2), (score, ref)
    print("KERNEL_OK")
</pallas_src>

<mosaic_0001>
module attributes {stable_mosaic.version = 11 : i64} {
  func.func @_gru_kernel(%arg0: i32, %arg1: i32, %arg2: memref<4x8x384xf32, #tpu.memory_space<vmem>>, %arg3: memref<128x384xbf16, #tpu.memory_space<vmem>>, %arg4: memref<1x128xf32, #tpu.memory_space<vmem>>, %arg5: memref<1x128xf32, #tpu.memory_space<vmem>>, %arg6: memref<1x1xf32, #tpu.memory_space<vmem>>, %arg7: memref<8x1xf32, #tpu.memory_space<vmem>>, %arg8: memref<8x128xf32, #tpu.memory_space<vmem>>) attributes {dimension_semantics = [#tpu.dimension_semantics<parallel>, #tpu.dimension_semantics<arbitrary>], iteration_bounds = array<i64: 1, 2>, scalar_prefetch = 0 : i64, scratch_operands = 1 : i64, tpu.core_type = #tpu.core_type<tc>, window_params = [{transform_indices = @transform_0, window_bounds = array<i64: 4, 8, 384>}, {pipeline_mode = #tpu.pipeline_mode<synchronous>, transform_indices = @transform_1, window_bounds = array<i64: 128, 384>}, {pipeline_mode = #tpu.pipeline_mode<synchronous>, transform_indices = @transform_2, window_bounds = array<i64: 1, 128>}, {pipeline_mode = #tpu.pipeline_mode<synchronous>, transform_indices = @transform_3, window_bounds = array<i64: 1, 128>}, {pipeline_mode = #tpu.pipeline_mode<synchronous>, transform_indices = @transform_4, window_bounds = array<i64: 1, 1>}, {transform_indices = @transform_5, window_bounds = array<i64: 8, 1>}]} {
    %c0_i32 = arith.constant 0 : i32
    %0 = arith.cmpi eq, %arg1, %c0_i32 : i32
    %1 = arith.extui %0 : i1 to i32
    %c0_i32_0 = arith.constant 0 : i32
    %2 = arith.cmpi ne, %1, %c0_i32_0 : i32
    scf.if %2 {
      %cst_38 = arith.constant 0.000000e+00 : f32
      %153 = vector.broadcast %cst_38 : f32 to vector<8x128xf32>
      %c0_39 = arith.constant 0 : index
      %c0_40 = arith.constant 0 : index
      %154 = vector.load %arg8[%c0_39, %c0_40] : memref<8x128xf32, #tpu.memory_space<vmem>>, vector<8x128xf32>
      tpu.vector_store %arg8[%c0_39, %c0_40], %153 {strides = array<i32>} : memref<8x128xf32, #tpu.memory_space<vmem>>, vector<8x128xf32>,
    } else {
    }
    %c0 = arith.constant 0 : index
    %c0_1 = arith.constant 0 : index
    %3 = vector.load %arg3[%c0, %c0_1] : memref<128x384xbf16, #tpu.memory_space<vmem>>, vector<128x384xbf16>
    %c0_2 = arith.constant 0 : index
    %c0_3 = arith.constant 0 : index
    %4 = vector.load %arg4[%c0_2, %c0_3] : memref<1x128xf32, #tpu.memory_space<vmem>>, vector<1x128xf32>
    %5 = vector.shape_cast %4 : vector<1x128xf32> to vector<1x128xf32>
    %6 = vector.broadcast %5 : vector<1x128xf32> to vector<8x128xf32>
    %c4_i32 = arith.constant 4 : i32
    %7 = arith.muli %arg1, %c4_i32 : i32
    %c0_4 = arith.constant 0 : index
    %c0_5 = arith.constant 0 : index
    %8 = vector.load %arg8[%c0_4, %c0_5] : memref<8x128xf32, #tpu.memory_space<vmem>>, vector<8x128xf32>
    %c0_i32_6 = arith.constant 0 : i32
    %9 = arith.index_cast %c0_i32_6 : i32 to index
    %c0_7 = arith.constant 0 : index
    %c0_8 = arith.constant 0 : index
    %10 = vector.load %arg2[%9, %c0_7, %c0_8] : memref<4x8x384xf32, #tpu.memory_space<vmem>>, vector<1x8x384xf32>
    %11 = vector.shape_cast %10 : vector<1x8x384xf32> to vector<8x384xf32>
    %12 = arith.truncf %8 : vector<8x128xf32> to vector<8x128xbf16>
    %cst = arith.constant dense<0.000000e+00> : vector<8x384xf32>
    %13 = tpu.matmul %12, %3, %cst {dimension_numbers = #tpu.dot_dimension_numbers<[1], [0], [0], [1], [0, 0, 1, 1], [], []>} : vector<8x128xbf16>, vector<128x384xbf16>, vector<8x384xf32> -> vector<8x384xf32>
    %14 = vector.extract_strided_slice %11 {offsets = [0, 0], sizes = [8, 128], strides = [1, 1]} : vector<8x384xf32> to vector<8x128xf32>
    %15 = vector.extract_strided_slice %13 {offsets = [0, 0], sizes = [8, 128], strides = [1, 1]} : vector<8x384xf32> to vector<8x128xf32>
    %16 = arith.addf %14, %15 : vector<8x128xf32>
    %17 = arith.negf %16 : vector<8x128xf32>
    %18 = math.exp %17 : vector<8x128xf32>
    %cst_9 = arith.constant 1.000000e+00 : f32
    %19 = vector.broadcast %cst_9 : f32 to vector<8x128xf32>
    %20 = arith.addf %19, %18 : vector<8x128xf32>
    %21 = arith.divf %19, %20 : vector<8x128xf32>
    %22 = vector.extract_strided_slice %11 {offsets = [0, 128], sizes = [8, 128], strides = [1, 1]} : vector<8x384xf32> to vector<8x128xf32>
    %23 = vector.extract_strided_slice %13 {offsets = [0, 128], sizes = [8, 128], strides = [1, 1]} : vector<8x384xf32> to vector<8x128xf32>
    %24 = arith.addf %22, %23 : vector<8x128xf32>
    %25 = arith.negf %24 : vector<8x128xf32>
    %26 = math.exp %25 : vector<8x128xf32>
    %cst_10 = arith.constant 1.000000e+00 : f32
    %27 = vector.broadcast %cst_10 : f32 to vector<8x128xf32>
    %28 = arith.addf %27, %26 : vector<8x128xf32>
    %29 = arith.divf %27, %28 : vector<8x128xf32>
    %30 = vector.extract_strided_slice %11 {offsets = [0, 256], sizes = [8, 128], strides = [1, 1]} : vector<8x384xf32> to vector<8x128xf32>
    %31 = vector.extract_strided_slice %13 {offsets = [0, 256], sizes = [8, 128], strides = [1, 1]} : vector<8x384xf32> to vector<8x128xf32>
    %32 = arith.addf %31, %6 : vector<8x128xf32>
    %33 = arith.mulf %21, %32 : vector<8x128xf32>
    %34 = arith.addf %30, %33 : vector<8x128xf32>
    %35 = math.tanh %34 : vector<8x128xf32>
    %cst_11 = arith.constant 1.000000e+00 : f32
    %36 = vector.broadcast %cst_11 : f32 to vector<8x128xf32>
    %37 = arith.subf %36, %29 : vector<8x128xf32>
    %38 = arith.mulf %37, %35 : vector<8x128xf32>
    %39 = arith.mulf %29, %8 : vector<8x128xf32>
    %40 = arith.addf %38, %39 : vector<8x128xf32>
    %41 = arith.addi %7, %c0_i32_6 : i32
    %c8_i32 = arith.constant 8 : i32
    %42 = arith.cmpi slt, %41, %c8_i32 : i32
    %43 = arith.select %42, %40, %8 : vector<8x128xf32>
    %c1_i32 = arith.constant 1 : i32
    %44 = arith.index_cast %c1_i32 : i32 to index
    %c0_12 = arith.constant 0 : index
    %c0_13 = arith.constant 0 : index
    %45 = vector.load %arg2[%44, %c0_12, %c0_13] : memref<4x8x384xf32, #tpu.memory_space<vmem>>, vector<1x8x384xf32>
    %46 = vector.shape_cast %45 : vector<1x8x384xf32> to vector<8x384xf32>
    %47 = arith.truncf %43 : vector<8x128xf32> to vector<8x128xbf16>
    %cst_14 = arith.constant dense<0.000000e+00> : vector<8x384xf32>
    %48 = tpu.matmul %47, %3, %cst_14 {dimension_numbers = #tpu.dot_dimension_numbers<[1], [0], [0], [1], [0, 0, 1, 1], [], []>} : vector<8x128xbf16>, vector<128x384xbf16>, vector<8x384xf32> -> vector<8x384xf32>
    %49 = vector.extract_strided_slice %46 {offsets = [0, 0], sizes = [8, 128], strides = [1, 1]} : vector<8x384xf32> to vector<8x128xf32>
    %50 = vector.extract_strided_slice %48 {offsets = [0, 0], sizes = [8, 128], strides = [1, 1]} : vector<8x384xf32> to vector<8x128xf32>
    %51 = arith.addf %49, %50 : vector<8x128xf32>
    %52 = arith.negf %51 : vector<8x128xf32>
    %53 = math.exp %52 : vector<8x128xf32>
    %cst_15 = arith.constant 1.000000e+00 : f32
    %54 = vector.broadcast %cst_15 : f32 to vector<8x128xf32>
    %55 = arith.addf %54, %53 : vector<8x128xf32>
    %56 = arith.divf %54, %55 : vector<8x128xf32>
    %57 = vector.extract_strided_slice %46 {offsets = [0, 128], sizes = [8, 128], strides = [1, 1]} : vector<8x384xf32> to vector<8x128xf32>
    %58 = vector.extract_strided_slice %48 {offsets = [0, 128], sizes = [8, 128], strides = [1, 1]} : vector<8x384xf32> to vector<8x128xf32>
    %59 = arith.addf %57, %58 : vector<8x128xf32>
    %60 = arith.negf %59 : vector<8x128xf32>
    %61 = math.exp %60 : vector<8x128xf32>
    %cst_16 = arith.constant 1.000000e+00 : f32
    %62 = vector.broadcast %cst_16 : f32 to vector<8x128xf32>
    %63 = arith.addf %62, %61 : vector<8x128xf32>
    %64 = arith.divf %62, %63 : vector<8x128xf32>
    %65 = vector.extract_strided_slice %46 {offsets = [0, 256], sizes = [8, 128], strides = [1, 1]} : vector<8x384xf32> to vector<8x128xf32>
    %66 = vector.extract_strided_slice %48 {offsets = [0, 256], sizes = [8, 128], strides = [1, 1]} : vector<8x384xf32> to vector<8x128xf32>
    %67 = arith.addf %66, %6 : vector<8x128xf32>
    %68 = arith.mulf %56, %67 : vector<8x128xf32>
    %69 = arith.addf %65, %68 : vector<8x128xf32>
    %70 = math.tanh %69 : vector<8x128xf32>
    %cst_17 = arith.constant 1.000000e+00 : f32
    %71 = vector.broadcast %cst_17 : f32 to vector<8x128xf32>
    %72 = arith.subf %71, %64 : vector<8x128xf32>
    %73 = arith.mulf %72, %70 : vector<8x128xf32>
    %74 = arith.mulf %64, %43 : vector<8x128xf32>
    %75 = arith.addf %73, %74 : vector<8x128xf32>
    %76 = arith.addi %7, %c1_i32 : i32
    %c8_i32_18 = arith.constant 8 : i32
    %77 = arith.cmpi slt, %76, %c8_i32_18 : i32
    %78 = arith.select %77, %75, %43 : vector<8x128xf32>
    %c2_i32 = arith.constant 2 : i32
    %79 = arith.index_cast %c2_i32 : i32 to index
    %c0_19 = arith.constant 0 : index
    %c0_20 = arith.constant 0 : index
    %80 = vector.load %arg2[%79, %c0_19, %c0_20] : memref<4x8x384xf32, #tpu.memory_space<vmem>>, vector<1x8x384xf32>
    %81 = vector.shape_cast %80 : vector<1x8x384xf32> to vector<8x384xf32>
    %82 = arith.truncf %78 : vector<8x128xf32> to vector<8x128xbf16>
    %cst_21 = arith.constant dense<0.000000e+00> : vector<8x384xf32>
    %83 = tpu.matmul %82, %3, %cst_21 {dimension_numbers = #tpu.dot_dimension_numbers<[1], [0], [0], [1], [0, 0, 1, 1], [], []>} : vector<8x128xbf16>, vector<128x384xbf16>, vector<8x384xf32> -> vector<8x384xf32>
    %84 = vector.extract_strided_slice %81 {offsets = [0, 0], sizes = [8, 128], strides = [1, 1]} : vector<8x384xf32> to vector<8x128xf32>
    %85 = vector.extract_strided_slice %83 {offsets = [0, 0], sizes = [8, 128], strides = [1, 1]} : vector<8x384xf32> to vector<8x128xf32>
    %86 = arith.addf %84, %85 : vector<8x128xf32>
    %87 = arith.negf %86 : vector<8x128xf32>
    %88 = math.exp %87 : vector<8x128xf32>
    %cst_22 = arith.constant 1.000000e+00 : f32
    %89 = vector.broadcast %cst_22 : f32 to vector<8x128xf32>
    %90 = arith.addf %89, %88 : vector<8x128xf32>
    %91 = arith.divf %89, %90 : vector<8x128xf32>
    %92 = vector.extract_strided_slice %81 {offsets = [0, 128], sizes = [8, 128], strides = [1, 1]} : vector<8x384xf32> to vector<8x128xf32>
    %93 = vector.extract_strided_slice %83 {offsets = [0, 128], sizes = [8, 128], strides = [1, 1]} : vector<8x384xf32> to vector<8x128xf32>
    %94 = arith.addf %92, %93 : vector<8x128xf32>
    %95 = arith.negf %94 : vector<8x128xf32>
    %96 = math.exp %95 : vector<8x128xf32>
    %cst_23 = arith.constant 1.000000e+00 : f32
    %97 = vector.broadcast %cst_23 : f32 to vector<8x128xf32>
    %98 = arith.addf %97, %96 : vector<8x128xf32>
    %99 = arith.divf %97, %98 : vector<8x128xf32>
    %100 = vector.extract_strided_slice %81 {offsets = [0, 256], sizes = [8, 128], strides = [1, 1]} : vector<8x384xf32> to vector<8x128xf32>
    %101 = vector.extract_strided_slice %83 {offsets = [0, 256], sizes = [8, 128], strides = [1, 1]} : vector<8x384xf32> to vector<8x128xf32>
    %102 = arith.addf %101, %6 : vector<8x128xf32>
    %103 = arith.mulf %91, %102 : vector<8x128xf32>
    %104 = arith.addf %100, %103 : vector<8x128xf32>
    %105 = math.tanh %104 : vector<8x128xf32>
    %cst_24 = arith.constant 1.000000e+00 : f32
    %106 = vector.broadcast %cst_24 : f32 to vector<8x128xf32>
    %107 = arith.subf %106, %99 : vector<8x128xf32>
    %108 = arith.mulf %107, %105 : vector<8x128xf32>
    %109 = arith.mulf %99, %78 : vector<8x128xf32>
    %110 = arith.addf %108, %109 : vector<8x128xf32>
    %111 = arith.addi %7, %c2_i32 : i32
    %c8_i32_25 = arith.constant 8 : i32
    %112 = arith.cmpi slt, %111, %c8_i32_25 : i32
    %113 = arith.select %112, %110, %78 : vector<8x128xf32>
    %c3_i32 = arith.constant 3 : i32
    %114 = arith.index_cast %c3_i32 : i32 to index
    %c0_26 = arith.constant 0 : index
    %c0_27 = arith.constant 0 : index
    %115 = vector.load %arg2[%114, %c0_26, %c0_27] : memref<4x8x384xf32, #tpu.memory_space<vmem>>, vector<1x8x384xf32>
    %116 = vector.shape_cast %115 : vector<1x8x384xf32> to vector<8x384xf32>
    %117 = arith.truncf %113 : vector<8x128xf32> to vector<8x128xbf16>
    %cst_28 = arith.constant dense<0.000000e+00> : vector<8x384xf32>
    %118 = tpu.matmul %117, %3, %cst_28 {dimension_numbers = #tpu.dot_dimension_numbers<[1], [0], [0], [1], [0, 0, 1, 1], [], []>} : vector<8x128xbf16>, vector<128x384xbf16>, vector<8x384xf32> -> vector<8x384xf32>
    %119 = vector.extract_strided_slice %116 {offsets = [0, 0], sizes = [8, 128], strides = [1, 1]} : vector<8x384xf32> to vector<8x128xf32>
    %120 = vector.extract_strided_slice %118 {offsets = [0, 0], sizes = [8, 128], strides = [1, 1]} : vector<8x384xf32> to vector<8x128xf32>
    %121 = arith.addf %119, %120 : vector<8x128xf32>
    %122 = arith.negf %121 : vector<8x128xf32>
    %123 = math.exp %122 : vector<8x128xf32>
    %cst_29 = arith.constant 1.000000e+00 : f32
    %124 = vector.broadcast %cst_29 : f32 to vector<8x128xf32>
    %125 = arith.addf %124, %123 : vector<8x128xf32>
    %126 = arith.divf %124, %125 : vector<8x128xf32>
    %127 = vector.extract_strided_slice %116 {offsets = [0, 128], sizes = [8, 128], strides = [1, 1]} : vector<8x384xf32> to vector<8x128xf32>
    %128 = vector.extract_strided_slice %118 {offsets = [0, 128], sizes = [8, 128], strides = [1, 1]} : vector<8x384xf32> to vector<8x128xf32>
    %129 = arith.addf %127, %128 : vector<8x128xf32>
    %130 = arith.negf %129 : vector<8x128xf32>
    %131 = math.exp %130 : vector<8x128xf32>
    %cst_30 = arith.constant 1.000000e+00 : f32
    %132 = vector.broadcast %cst_30 : f32 to vector<8x128xf32>
    %133 = arith.addf %132, %131 : vector<8x128xf32>
    %134 = arith.divf %132, %133 : vector<8x128xf32>
    %135 = vector.extract_strided_slice %116 {offsets = [0, 256], sizes = [8, 128], strides = [1, 1]} : vector<8x384xf32> to vector<8x128xf32>
    %136 = vector.extract_strided_slice %118 {offsets = [0, 256], sizes = [8, 128], strides = [1, 1]} : vector<8x384xf32> to vector<8x128xf32>
    %137 = arith.addf %136, %6 : vector<8x128xf32>
    %138 = arith.mulf %126, %137 : vector<8x128xf32>
    %139 = arith.addf %135, %138 : vector<8x128xf32>
    %140 = math.tanh %139 : vector<8x128xf32>
    %cst_31 = arith.constant 1.000000e+00 : f32
    %141 = vector.broadcast %cst_31 : f32 to vector<8x128xf32>
    %142 = arith.subf %141, %134 : vector<8x128xf32>
    %143 = arith.mulf %142, %140 : vector<8x128xf32>
    %144 = arith.mulf %134, %113 : vector<8x128xf32>
    %145 = arith.addf %143, %144 : vector<8x128xf32>
    %146 = arith.addi %7, %c3_i32 : i32
    %c8_i32_32 = arith.constant 8 : i32
    %147 = arith.cmpi slt, %146, %c8_i32_32 : i32
    %148 = arith.select %147, %145, %113 : vector<8x128xf32>
    %c4_i32_33 = arith.constant 4 : i32
    %c0_34 = arith.constant 0 : index
    %c0_35 = arith.constant 0 : index
    %149 = vector.load %arg8[%c0_34, %c0_35] : memref<8x128xf32, #tpu.memory_space<vmem>>, vector<8x128xf32>
    tpu.vector_store %arg8[%c0_34, %c0_35], %148 {strides = array<i32>} : memref<8x128xf32, #tpu.memory_space<vmem>>, vector<8x128xf32>,
    %c1_i32_36 = arith.constant 1 : i32
    %150 = arith.cmpi eq, %arg1, %c1_i32_36 : i32
    %151 = arith.extui %150 : i1 to i32
    %c0_i32_37 = arith.constant 0 : i32
    %152 = arith.cmpi ne, %151, %c0_i32_37 : i32
    scf.if %152 {
      %c0_38 = arith.constant 0 : index
      %c0_39 = arith.constant 0 : index
      %153 = vector.load %arg5[%c0_38, %c0_39] : memref<1x128xf32, #tpu.memory_space<vmem>>, vector<1x128xf32>
      %154 = vector.broadcast %153 : vector<1x128xf32> to vector<8x128xf32>
      %155 = arith.mulf %148, %154 : vector<8x128xf32>
      %cst_40 = arith.constant dense<0.000000e+00> : vector<8xf32>
      %156 = vector.multi_reduction <add>, %155, %cst_40 [1] : vector<8x128xf32> to vector<8xf32>
      %157 = vector.shape_cast %156 : vector<8xf32> to vector<8x1xf32>
      %c0_41 = arith.constant 0 : index
      %c0_42 = arith.constant 0 : index
      %158 = vector.load %arg6[%c0_41, %c0_42] : memref<1x1xf32, #tpu.memory_space<vmem>>, vector<1x1xf32>
      %159 = vector.broadcast %158 : vector<1x1xf32> to vector<8x1xf32>
      %160 = arith.addf %157, %159 : vector<8x1xf32>
      %c0_43 = arith.constant 0 : index
      %c0_44 = arith.constant 0 : index
      %161 = vector.load %arg7[%c0_43, %c0_44] : memref<8x1xf32, #tpu.memory_space<vmem>>, vector<8x1xf32>
      tpu.vector_store %arg7[%c0_43, %c0_44], %160 {strides = array<i32>} : memref<8x1xf32, #tpu.memory_space<vmem>>, vector<8x1xf32>,
    } else {
    }
    return
  }
  func.func @transform_0(%arg0: i32, %arg1: i32) -> (i32, i32, i32) {
    %c0_i32 = arith.constant 0 : i32
    %c0_i32_0 = arith.constant 0 : i32
    return %arg1, %arg0, %c0_i32 : i32, i32, i32
  }
  func.func @transform_1(%arg0: i32, %arg1: i32) -> (i32, i32) {
    %c0_i32 = arith.constant 0 : i32
    %c0_i32_0 = arith.constant 0 : i32
    %c0_i32_1 = arith.constant 0 : i32
    return %c0_i32, %c0_i32_0 : i32, i32
  }
  func.func @transform_2(%arg0: i32, %arg1: i32) -> (i32, i32) {
    %c0_i32 = arith.constant 0 : i32
    %c0_i32_0 = arith.constant 0 : i32
    %c0_i32_1 = arith.constant 0 : i32
    return %c0_i32, %c0_i32_0 : i32, i32
  }
  func.func @transform_3(%arg0: i32, %arg1: i32) -> (i32, i32) {
    %c0_i32 = arith.constant 0 : i32
    %c0_i32_0 = arith.constant 0 : i32
    %c0_i32_1 = arith.constant 0 : i32
    return %c0_i32, %c0_i32_0 : i32, i32
  }
  func.func @transform_4(%arg0: i32, %arg1: i32) -> (i32, i32) {
    %c0_i32 = arith.constant 0 : i32
    %c0_i32_0 = arith.constant 0 : i32
    %c0_i32_1 = arith.constant 0 : i32
    return %c0_i32, %c0_i32_0 : i32, i32
  }
  func.func @transform_5(%arg0: i32, %arg1: i32) -> (i32, i32) {
    %c0_i32 = arith.constant 0 : i32
    %c0_i32_0 = arith.constant 0 : i32
    return %arg0, %c0_i32 : i32, i32
  }
}

</mosaic_0001>

<llo_original>
// kernel: regression_rnn_forward.1
$region0: #{regression_rnn_forward.1}
  #allocation0 [shape = 'u32[]', space=smem, size = 0x4, offset = 0x4, fixed_abs, tag = 'smem constant byte address 0x4 - core index']
  #allocation1 [shape = 'u32[144,128]{1,0:T(1,128)}', space=vmem, size = 0x12000, scoped, tag = 'internal scratch']
  #allocation2 [shape = 'f32[8,128]{1,0:T(8,128)}', space=vmem, size = 0x1000, scoped, tag = 'scratch operand']
  #allocation3 [shape = 'f32[1,1]{1,0:T(1,128)S(1)}', space=vmem, size = 0x200, scoped, tag = 'scoped memory for regression_rnn_forward.1']
  %s0 = inlined_call_operand.vmem [shape: f32[8,8,384], index: 0, kind: input, shape index: {}]
  %s1 = inlined_call_operand.vmem [shape: bf16[128,384], index: 1, kind: input, shape index: {}]
  %s2 = inlined_call_operand.vmem [shape: f32[1,128], index: 2, kind: input, shape index: {}]
  %s3 = inlined_call_operand.vmem [shape: f32[1,128], index: 3, kind: input, shape index: {}]
  %s4 = inlined_call_operand.<no memory space> [shape: f32[1,1], index: 4, kind: input, shape index: {}]
  %s5 = inlined_call_operand.vmem [shape: f32[8,1], index: 5, kind: output, shape index: {}]
  %s6 = sld [smem:[#allocation0]]
  $region61: #{regression_rnn_forward.1} parent=0
    _
  %s8 = ssub.s32 1, %s6
  %s9 = scalar_select 0, %s8, %s6
  %v10 = vstv %s4
  %11 = vst [vmem:[#allocation3] sm:$0x1] %v10
  loop: start=0, step=1, limit=4
  $region2: #{regression_rnn_forward.1} parent=0 // loop_pre_header
    _
  $region3: #{regression_rnn_forward.1} parent=0 // loop_header
    %s13 = sphi 0, %s17
    %p14 = scmp.ge.s32.totalorder %s13, 4
    %s20 = sphi 0, %s32
    %s21 = sphi 0, %s28
    %s22 = sphi 0, %s20
    %s23 = sphi 0, %s21
    %s24 = sphi 0, %s22
    %s25 = sphi 0, %s23
    %s37 = sphi 0, %s39
    %s40 = sphi 0, %s37
    %s41 = sphi 0, %s40
    %s57 = sphi 0, %s41
    %s61 = sphi 0, %s61
    %s63 = sphi 0, %s61
    %s64 = sphi 0, %s63
    %s78 = sphi 0, %s64
    %s82 = sphi 0, %s82
    %s84 = sphi 0, %s82
    %s85 = sphi 0, %s84
    %s99 = sphi 0, %s85
    %s103 = sphi 0, %s103
    %s105 = sphi 0, %s103
    %s106 = sphi 0, %s105
    %s120 = sphi 0, %s106
    %s124 = sphi 0, %s124
    %s126 = sphi 0, %s124
    %s127 = sphi 0, %s126
    %s141 = sphi 0, %s127
    %s147 = sphi 0, %s149
    %s150 = sphi 0, %s147
    %s151 = sphi 0, %s150
    %s167 = sphi 0, %s151
  $region4: #{regression_rnn_forward.1} parent=0 // loop_header_branch
    %16 = sbr.rel (%p14) target = $region8
  $region5: #{regression_rnn_forward.1} parent=0 // loop_body
    %s18 = ssub.s32 %s13, 1
    %s19 = ssub.s32 %s13, 2
    %s26 = sadd.s32 1, %s21
    %p27 = scmp.ge.s32.totalorder %s26, 2
    %s28 = scalar_select %p27, 0, %s26
    %s29 = sadd.s32 1, %s20
    %s30 = scalar_select %p27, %s29, %s20
    %p31 = scmp.ge.s32.totalorder %s30, 1
    %s32 = scalar_select %p31, 0, %s30
    %s33 = ssub.s32 %s21, %s28
    %s34 = ssub.s32 %s20, %s32
    %s35 = sor.u32 %s33, %s34
    %p36 = scmp.eq.s32.totalorder %s35, 0
    %s38 = sadd.s32 %s37, 1
    %s39 = scalar_select %p36, %s37, %s38
    %p42 = pneg %p36
    %p43 = scmp.eq.s32.totalorder %s13, 1
    %p44 = por %p42, %p43
    %p45 = scmp.ne.s32.totalorder %s37, %s40
    %p46 = scmp.eq.s32.totalorder %s13, 0
    %p47 = por %p45, %p46
    %p48 = scmp.ne.s32.totalorder %s37, %s40
    %p49 = scmp.eq.s32.totalorder %s18, 1
    %p50 = por %p48, %p49
    %p51 = scmp.ne.s32.totalorder %s40, %s41
    %p52 = scmp.eq.s32.totalorder %s18, 0
    %p53 = por %p51, %p52
    %p54 = scmp.ne.s32.totalorder %s40, %s41
    %p55 = scmp.eq.s32.totalorder %s19, 1
    %p56 = por %p54, %p55
    %p58 = scmp.ne.s32.totalorder %s41, %s57
    %p59 = scmp.eq.s32.totalorder %s19, 0
    %p60 = por %p58, %p59
    %s62 = sadd.s32 %s61, 1
    %p65 = scmp.eq.s32.totalorder %s13, 1
    %p66 = scmp.ne.s32.totalorder %s61, %s63
    %p67 = scmp.eq.s32.totalorder %s13, 0
    %p68 = por %p66, %p67
    %p69 = scmp.ne.s32.totalorder %s61, %s63
    %p70 = scmp.eq.s32.totalorder %s18, 1
    %p71 = por %p69, %p70
    %p72 = scmp.ne.s32.totalorder %s63, %s64
    %p73 = scmp.eq.s32.totalorder %s18, 0
    %p74 = por %p72, %p73
    %p75 = scmp.ne.s32.totalorder %s63, %s64
    %p76 = scmp.eq.s32.totalorder %s19, 1
    %p77 = por %p75, %p76
    %p79 = scmp.ne.s32.totalorder %s64, %s78
    %p80 = scmp.eq.s32.totalorder %s19, 0
    %p81 = por %p79, %p80
    %s83 = sadd.s32 %s82, 1
    %p86 = scmp.eq.s32.totalorder %s13, 1
    %p87 = scmp.ne.s32.totalorder %s82, %s84
    %p88 = scmp.eq.s32.totalorder %s13, 0
    %p89 = por %p87, %p88
    %p90 = scmp.ne.s32.totalorder %s82, %s84
    %p91 = scmp.eq.s32.totalorder %s18, 1
    %p92 = por %p90, %p91
    %p93 = scmp.ne.s32.totalorder %s84, %s85
    %p94 = scmp.eq.s32.totalorder %s18, 0
    %p95 = por %p93, %p94
    %p96 = scmp.ne.s32.totalorder %s84, %s85
    %p97 = scmp.eq.s32.totalorder %s19, 1
    %p98 = por %p96, %p97
    %p100 = scmp.ne.s32.totalorder %s85, %s99
    %p101 = scmp.eq.s32.totalorder %s19, 0
    %p102 = por %p100, %p101
    %s104 = sadd.s32 %s103, 1
    %p107 = scmp.eq.s32.totalorder %s13, 1
    %p108 = scmp.ne.s32.totalorder %s103, %s105
    %p109 = scmp.eq.s32.totalorder %s13, 0
    %p110 = por %p108, %p109
    %p111 = scmp.ne.s32.totalorder %s103, %s105
    %p112 = scmp.eq.s32.totalorder %s18, 1
    %p113 = por %p111, %p112
    %p114 = scmp.ne.s32.totalorder %s105, %s106
    %p115 = scmp.eq.s32.totalorder %s18, 0
    %p116 = por %p114, %p115
    %p117 = scmp.ne.s32.totalorder %s105, %s106
    %p118 = scmp.eq.s32.totalorder %s19, 1
    %p119 = por %p117, %p118
    %p121 = scmp.ne.s32.totalorder %s106, %s120
    %p122 = scmp.eq.s32.totalorder %s19, 0
    %p123 = por %p121, %p122
    %s125 = sadd.s32 %s124, 1
    %p128 = scmp.eq.s32.totalorder %s13, 1
    %p129 = scmp.ne.s32.totalorder %s124, %s126
    %p130 = scmp.eq.s32.totalorder %s13, 0
    %p131 = por %p129, %p130
    %p132 = scmp.ne.s32.totalorder %s124, %s126
    %p133 = scmp.eq.s32.totalorder %s18, 1
    %p134 = por %p132, %p133
    %p135 = scmp.ne.s32.totalorder %s126, %s127
    %p136 = scmp.eq.s32.totalorder %s18, 0
    %p137 = por %p135, %p136
    %p138 = scmp.ne.s32.totalorder %s126, %s127
    %p139 = scmp.eq.s32.totalorder %s19, 1
    %p140 = por %p138, %p139
    %p142 = scmp.ne.s32.totalorder %s127, %s141
    %p143 = scmp.eq.s32.totalorder %s19, 0
    %p144 = por %p142, %p143
    %s145 = ssub.s32 %s20, %s32
    %p146 = scmp.eq.s32.totalorder %s145, 0
    %s148 = sadd.s32 %s147, 1
    %s149 = scalar_select %p146, %s147, %s148
    %p152 = pneg %p146
    %p153 = scmp.eq.s32.totalorder %s13, 1
    %p154 = por %p152, %p153
    %p155 = scmp.ne.s32.totalorder %s147, %s150
    %p156 = scmp.eq.s32.totalorder %s13, 0
    %p157 = por %p155, %p156
    %p158 = scmp.ne.s32.totalorder %s147, %s150
    %p159 = scmp.eq.s32.totalorder %s18, 1
    %p160 = por %p158, %p159
    %p161 = scmp.ne.s32.totalorder %s150, %s151
    %p162 = scmp.eq.s32.totalorder %s18, 0
    %p163 = por %p161, %p162
    %p164 = scmp.ne.s32.totalorder %s150, %s151
    %p165 = scmp.eq.s32.totalorder %s19, 1
    %p166 = por %p164, %p165
    %p168 = scmp.ne.s32.totalorder %s151, %s167
    %p169 = scmp.eq.s32.totalorder %s19, 0
    %p170 = por %p168, %p169
    %p171 = scmp.le.s32.totalorder 1, %s13
    %p172 = scmp.lt.s32.totalorder %s13, 3
    %p173 = pnand %p171, %p172
    %p174 = pneg %p173
    // Predicated region
    $region9: #{regression_rnn_forward.1} parent=5 // pred_check
      _
    $region10: #{regression_rnn_forward.1} parent=5 // pred_check_branch
      %176 = sbr.rel (%p173) target = $region12
    $region11: #{regression_rnn_forward.1} parent=5 // pred_region
      %s177 = ssub.s32 %s13, 1
      // Predicated region
      $region13: #{regression_rnn_forward.1} parent=11 // pred_check
        %p178 = pneg %p74
      $region14: #{regression_rnn_forward.1} parent=11 // pred_check_branch
        %180 = sbr.rel (%p178) target = $region16
      $region15: #{regression_rnn_forward.1} parent=11 // pred_region
        _
      $region16: #{regression_rnn_forward.1} parent=11 // pred_fallthru
        _
      // Predicated region
      $region17: #{regression_rnn_forward.1} parent=11 // pred_check
        %p181 = pneg %p95
      $region18: #{regression_rnn_forward.1} parent=11 // pred_check_branch
        %183 = sbr.rel (%p181) target = $region20
      $region19: #{regression_rnn_forward.1} parent=11 // pred_region
        _
      $region20: #{regression_rnn_forward.1} parent=11 // pred_fallthru
        _
      // Predicated region
      $region21: #{regression_rnn_forward.1} parent=11 // pred_check
        %p184 = pneg %p116
      $region22: #{regression_rnn_forward.1} parent=11 // pred_check_branch
        %186 = sbr.rel (%p184) target = $region24
      $region23: #{regression_rnn_forward.1} parent=11 // pred_region
        _
      $region24: #{regression_rnn_forward.1} parent=11 // pred_fallthru
        _
      // Predicated region
      $region25: #{regression_rnn_forward.1} parent=11 // pred_check
        %p187 = pneg %p137
      $region26: #{regression_rnn_forward.1} parent=11 // pred_check_branch
        %189 = sbr.rel (%p187) target = $region28
      $region27: #{regression_rnn_forward.1} parent=11 // pred_region
        _
      $region28: #{regression_rnn_forward.1} parent=11 // pred_fallthru
        _
    $region12: #{regression_rnn_forward.1} parent=5 // pred_fallthru
      _
    %p190 = scmp.lt.s32.totalorder %s13, 2
    // Predicated region
    $region29: #{regression_rnn_forward.1} parent=5 // pred_check
      %p191 = pneg %p190
    $region30: #{regression_rnn_forward.1} parent=5 // pred_check_branch
      %193 = sbr.rel (%p191) target = $region32
    $region31: #{regression_rnn_forward.1} parent=5 // pred_region
      // Predicated region
      $region33: #{regression_rnn_forward.1} parent=31 // pred_check
        %p194 = pneg %p47
      $region34: #{regression_rnn_forward.1} parent=31 // pred_check_branch
        %196 = sbr.rel (%p194) target = $region36
      $region35: #{regression_rnn_forward.1} parent=31 // pred_region
        %s197 = smul.u32 4, %s21
        %p198 = scmp.lt.s32.totalorder %s197, 7
        %s199 = scalar_select %p198, %s197, 7
        %p200 = scmp.lt.s32.totalorder %s20, 0
        %s201 = scalar_select %p200, %s20, 0
        %s202 = smul.addr %s201, 3
        %s203 = smul.addr %s199, 3
        %s204 = sadd.s32 %s202, %s203
        %s205 = smul.addr %s204, 8
        %s206 = scalar_lea.vmem %s0, %s205
        %s207 = smul.u32 4, %s21
      $region36: #{regression_rnn_forward.1} parent=31 // pred_fallthru
        _
    $region32: #{regression_rnn_forward.1} parent=5 // pred_fallthru
      _
    %p208 = scmp.le.s32.totalorder 1, %s13
    %p209 = scmp.lt.s32.totalorder %s13, 3
    %p210 = pnand %p208, %p209
    %p211 = pneg %p210
    // Predicated region
    $region37: #{regression_rnn_forward.1} parent=5 // pred_check
      _
    $region38: #{regression_rnn_forward.1} parent=5 // pred_check_branch
      %213 = sbr.rel (%p210) target = $region40
    $region39: #{regression_rnn_forward.1} parent=5 // pred_region
      %s214 = ssub.s32 %s13, 1
      %s215 = smul.u32 4, %s23
      %p216 = scmp.lt.s32.totalorder %s215, 7
      %s217 = scalar_select %p216, %s215, 7
      %p218 = scmp.lt.s32.totalorder %s22, 0
      %s219 = scalar_select %p218, %s22, 0
      %s220 = smul.addr %s219, 3
      %s221 = smul.addr %s217, 3
      %s222 = sadd.s32 %s220, %s221
      %s223 = smul.addr %s222, 8
      %s224 = scalar_lea.vmem %s0, %s223
      %p225 = pneg %p53
      %p226 = pneg %p50
      %p227 = pneg %p74
      %p228 = pneg %p71
      %p229 = pneg %p95
      %p230 = pneg %p92
      %p231 = pneg %p116
      %p232 = pneg %p113
      %p233 = pneg %p137
      %p234 = pneg %p134
      %p235 = pneg %p163
      %p236 = pneg %p160
      %p237 = scmp.lt.s32.totalorder %s22, 0
      %s238 = scalar_select %p237, %s22, 0
      %s239 = smul.addr %s238, 8
      %s240 = scalar_lea.vmem %s5, %s239
      %s241 = smul.u32 4, %s23
      %p242 = scmp.lt.s32.totalorder %s241, 7
      %s243 = scalar_select %p242, %s241, 7
      %p244 = scmp.lt.s32.totalorder %s22, 0
      %s245 = scalar_select %p244, %s22, 0
      %s246 = smul.addr %s245, 3
      %s247 = smul.addr %s243, 3
      %s248 = sadd.s32 %s246, %s247
      %s249 = smul.addr %s248, 8
      %s250 = scalar_lea.vmem %s0, %s249
      %s251 = smul.u32 4, %s23
      %p252 = scmp.lt.s32.totalorder %s22, 0
      %s253 = scalar_select %p252, %s22, 0
      %s254 = smul.addr %s253, 8
      %s255 = scalar_lea.vmem %s5, %s254
      %p257 = scmp.eq.s32.totalorder %s23, 0
      // Predicated region
      $region41: #{regression_rnn_forward.1} parent=39 // pred_check
        %p258 = pneg %p257
      $region42: #{regression_rnn_forward.1} parent=39 // pred_check_branch
        %260 = sbr.rel (%p258) target = $region44
      $region43: #{regression_rnn_forward.1} parent=39 // pred_region
        %261 = vst [vmem:[#allocation2] sm:$0xff] 0.0
      $region44: #{regression_rnn_forward.1} parent=39 // pred_fallthru
        _
      %v262 = vld [vmem:[%s1] sm:$0xff]
      %v263 = vld [vmem:[%s1 + $0x8] sm:$0xf]
      %v264 = vld [vmem:[%s1 + $0xc] sm:$0xff]
      %v265 = vld [vmem:[%s1 + $0x14] sm:$0xf]
      %v266 = vld [vmem:[%s1 + $0x18] sm:$0xff]
      %v267 = vld [vmem:[%s1 + $0x20] sm:$0xf]
      %v268 = vld [vmem:[%s1 + $0x24] sm:$0xff]
      %v269 = vld [vmem:[%s1 + $0x2c] sm:$0xf]
      %v270 = vld [vmem:[%s1 + $0x30] sm:$0xff]
      %v271 = vld [vmem:[%s1 + $0x38] sm:$0xf]
      %v272 = vld [vmem:[%s1 + $0x3c] sm:$0xff]
      %v273 = vld [vmem:[%s1 + $0x44] sm:$0xf]
      %v274 = vld [vmem:[%s1 + $0x48] sm:$0xff]
      %v275 = vld [vmem:[%s1 + $0x50] sm:$0xf]
      %v276 = vld [vmem:[%s1 + $0x54] sm:$0xff]
      %v277 = vld [vmem:[%s1 + $0x5c] sm:$0xf]
      %v278 = vld [vmem:[%s1 + $0x60] sm:$0xff]
      %v279 = vld [vmem:[%s1 + $0x68] sm:$0xf]
      %v280 = vld [vmem:[%s1 + $0x6c] sm:$0xff]
      %v281 = vld [vmem:[%s1 + $0x74] sm:$0xf]
      %v282 = vld [vmem:[%s1 + $0x78] sm:$0xff]
      %v283 = vld [vmem:[%s1 + $0x80] sm:$0xf]
      %v284 = vld [vmem:[%s1 + $0x84] sm:$0xff]
      %v285 = vld [vmem:[%s1 + $0x8c] sm:$0xf]
      %v286 = vld [vmem:[%s1 + $0x90] sm:$0xff]
      %v287 = vld [vmem:[%s1 + $0x98] sm:$0xf]
      %v288 = vld [vmem:[%s1 + $0x9c] sm:$0xff]
      %v289 = vld [vmem:[%s1 + $0xa4] sm:$0xf]
      %v290 = vld [vmem:[%s1 + $0xa8] sm:$0xff]
      %v291 = vld [vmem:[%s1 + $0xb0] sm:$0xf]
      %v292 = vld [vmem:[%s1 + $0xb4] sm:$0xff]
      %v293 = vld [vmem:[%s1 + $0xbc] sm:$0xf]
      %v294 = vld [vmem:[%s2] sm:$0x1]
      %v296 = vlaneseq
      %v297 = vshrl.u32 %v296, 7
      %v298 = vsub.s32 0, %v297
      %v299 = vrot.slane %v294, %v298
      %s301 = smul.u32 %s23, 4
      %v302 = vld [vmem:[#allocation2] sm:$0xff]
      %v303 = vld [vmem:[%s250] sm:$0xff]
      %v304 = vld [vmem:[%s250 + $0x8] sm:$0xff]
      %v305 = vld [vmem:[%s250 + $0x10] sm:$0xff]
      %v306 = vpack.c.bf16 %v302, %v302
      %v339 = vunpack.c.l.b16 %v262
      %v340 = vunpack.c.h.b16 %v262
      %v341 = vunpack.c.l.b16 %v263
      %v342 = vunpack.c.l.b16 %v264
      %v343 = vunpack.c.h.b16 %v264
      %v344 = vunpack.c.l.b16 %v265
      %v345 = vunpack.c.l.b16 %v266
      %v346 = vunpack.c.h.b16 %v266
      %v347 = vunpack.c.l.b16 %v267
      %v348 = vunpack.c.l.b16 %v268
      %v349 = vunpack.c.h.b16 %v268
      %v350 = vunpack.c.l.b16 %v269
      %v351 = vunpack.c.l.b16 %v270
      %v352 = vunpack.c.h.b16 %v270
      %v353 = vunpack.c.l.b16 %v271
      %v354 = vunpack.c.l.b16 %v272
      %v355 = vunpack.c.h.b16 %v272
      %v356 = vunpack.c.l.b16 %v273
      %v357 = vunpack.c.l.b16 %v274
      %v358 = vunpack.c.h.b16 %v274
      %v359 = vunpack.c.l.b16 %v275
      %v360 = vunpack.c.l.b16 %v276
      %v361 = vunpack.c.h.b16 %v276
      %v362 = vunpack.c.l.b16 %v277
      %v363 = vunpack.c.l.b16 %v278
      %v364 = vunpack.c.h.b16 %v278
      %v365 = vunpack.c.l.b16 %v279
      %v366 = vunpack.c.l.b16 %v280
      %v367 = vunpack.c.h.b16 %v280
      %v368 = vunpack.c.l.b16 %v281
      %v369 = vunpack.c.l.b16 %v282
      %v370 = vunpack.c.h.b16 %v282
      %v371 = vunpack.c.l.b16 %v283
      %v372 = vunpack.c.l.b16 %v284
      %v373 = vunpack.c.h.b16 %v284
      %v374 = vunpack.c.l.b16 %v285
      %v375 = vunpack.c.l.b16 %v286
      %v376 = vunpack.c.h.b16 %v286
      %v377 = vunpack.c.l.b16 %v287
      %v378 = vunpack.c.l.b16 %v288
      %v379 = vunpack.c.h.b16 %v288
      %v380 = vunpack.c.l.b16 %v289
      %v381 = vunpack.c.l.b16 %v290
      %v382 = vunpack.c.h.b16 %v290
      %v383 = vunpack.c.l.b16 %v291
      %v384 = vunpack.c.l.b16 %v292
      %v385 = vunpack.c.h.b16 %v292
      %v386 = vunpack.c.l.b16 %v293
      %v387 = vpack.c.b16 %v342, %v339
      %v388 = vpack.c.b16 %v343, %v340
      %v389 = vpack.c.b16 %v344, %v341
      %v390 = vpack.c.b16 %v348, %v345
      %v391 = vpack.c.b16 %v349, %v346
      %v392 = vpack.c.b16 %v350, %v347
      %v393 = vpack.c.b16 %v354, %v351
      %v394 = vpack.c.b16 %v355, %v352
      %v395 = vpack.c.b16 %v356, %v353
      %v396 = vpack.c.b16 %v360, %v357
      %v397 = vpack.c.b16 %v361, %v358
      %v398 = vpack.c.b16 %v362, %v359
      %v399 = vpack.c.b16 %v366, %v363
      %v400 = vpack.c.b16 %v367, %v364
      %v401 = vpack.c.b16 %v368, %v365
      %v402 = vpack.c.b16 %v372, %v369
      %v403 = vpack.c.b16 %v373, %v370
      %v404 = vpack.c.b16 %v374, %v371
      %v405 = vpack.c.b16 %v378, %v375
      %v406 = vpack.c.b16 %v379, %v376
      %v407 = vpack.c.b16 %v380, %v377
      %v408 = vpack.c.b16 %v384, %v381
      %v409 = vpack.c.b16 %v385, %v382
      %v410 = vpack.c.b16 %v386, %v383
      %435 = vmatprep.subr.bf16.mxu0 %v388
      %436 = vmatpush1.bf16.msra.mxu0 %v387
      %437 = vmatprep.subr.bf16.mxu0 %v391
      %438 = vmatpush1.bf16.msra.mxu0 %v390
      %439 = vmatprep.subr.bf16.mxu0 %v394
      %440 = vmatpush1.bf16.msra.mxu0 %v393
      %441 = vmatprep.subr.bf16.mxu0 %v397
      %442 = vmatpush1.bf16.msra.mxu0 %v396
      %443 = vmatprep.subr.bf16.mxu0 %v400
      %444 = vmatpush1.bf16.msra.mxu0 %v399
      %445 = vmatprep.subr.bf16.mxu0 %v403
      %446 = vmatpush1.bf16.msra.mxu0 %v402
      %447 = vmatprep.subr.bf16.mxu0 %v406
      %448 = vmatpush1.bf16.msra.mxu0 %v405
      %449 = vmatprep.subr.bf16.mxu0 %v409
      %450 = vmatpush1.bf16.msra.mxu0 %v408
      %451 = vmatprep.subr.bf16.mxu0 0
      %452 = vmatpush1.bf16.msra.mxu0 0
      %453 = vmatprep.subr.bf16.mxu0 0
      %454 = vmatpush1.bf16.msra.mxu0 0
      %455 = vmatprep.subr.bf16.mxu0 0
      %456 = vmatpush1.bf16.msra.mxu0 0
      %457 = vmatprep.subr.bf16.mxu0 0
      %458 = vmatpush1.bf16.msra.mxu0 0
      %459 = vmatprep.subr.bf16.mxu0 0
      %460 = vmatpush1.bf16.msra.mxu0 0
      %461 = vmatprep.subr.bf16.mxu0 0
      %462 = vmatpush1.bf16.msra.mxu0 0
      %463 = vmatprep.subr.bf16.mxu0 0
      %464 = vmatpush1.bf16.msra.mxu0 0
      %465 = vmatprep.subr.bf16.mxu0 0
      %466 = vmatpush1.bf16.msra.mxu0 0
      %467 = vmatprep.mubr.bf16.mxu0 0
      %468 = vmatmul.mubr.bf16.gmra.mrb[0].mxu0 %v306
      %v469 = vpop.f32.mrb[0].mxu0
      %v470 = vadd.f32 0.0, %v469
      %v471 = vpop.f32.mrb[0].mxu0
      %v472 = vadd.f32 0.0, %v471
      %v473 = vpop.f32.mrb[0].mxu0
      %v474 = vpop.f32.mrb[0].mxu0
      %475 = vdwg.mxu0
      %476 = vmatprep.subr.bf16.mxu0 0
      %477 = vmatpush1.bf16.msra.mxu0 %v389
      %478 = vmatprep.subr.bf16.mxu0 0
      %479 = vmatpush1.bf16.msra.mxu0 %v392
      %480 = vmatprep.subr.bf16.mxu0 0
      %481 = vmatpush1.bf16.msra.mxu0 %v395
      %482 = vmatprep.subr.bf16.mxu0 0
      %483 = vmatpush1.bf16.msra.mxu0 %v398
      %484 = vmatprep.subr.bf16.mxu0 0
      %485 = vmatpush1.bf16.msra.mxu0 %v401
      %486 = vmatprep.subr.bf16.mxu0 0
      %487 = vmatpush1.bf16.msra.mxu0 %v404
      %488 = vmatprep.subr.bf16.mxu0 0
      %489 = vmatpush1.bf16.msra.mxu0 %v407
      %490 = vmatprep.subr.bf16.mxu0 0
      %491 = vmatpush1.bf16.msra.mxu0 %v410
      %492 = vmatprep.subr.bf16.mxu0 0
      %493 = vmatpush1.bf16.msra.mxu0 0
      %494 = vmatprep.subr.bf16.mxu0 0
      %495 = vmatpush1.bf16.msra.mxu0 0
      %496 = vmatprep.subr.bf16.mxu0 0
      %497 = vmatpush1.bf16.msra.mxu0 0
      %498 = vmatprep.subr.bf16.mxu0 0
      %499 = vmatpush1.bf16.msra.mxu0 0
      %500 = vmatprep.subr.bf16.mxu0 0
      %501 = vmatpush1.bf16.msra.mxu0 0
      %502 = vmatprep.subr.bf16.mxu0 0
      %503 = vmatpush1.bf16.msra.mxu0 0
      %504 = vmatprep.subr.bf16.mxu0 0
      %505 = vmatpush1.bf16.msra.mxu0 0
      %506 = vmatprep.subr.bf16.mxu0 0
      %507 = vmatpush1.bf16.msra.mxu0 0
      %508 = vmatprep.mubr.bf16.mxu0 0
      %509 = vmatmul.mubr.bf16.gmra.mrb[0].mxu0 %v306
      %v510 = vpop.f32.mrb[0].mxu0
      %v511 = vadd.f32 0.0, %v510
      %v512 = vpop.f32.mrb[0].mxu0
      %v513 = vpop.f32.mrb[0].mxu0
      %v514 = vpop.f32.mrb[0].mxu0
      %515 = vdwg.mxu0
      %v516 = vadd.f32 %v303, %v470
      %v517 = vxor.u32 %v516, 2147483648
      %v518 = vmul.f32 %v517, 1.442695
      %v519 = vpow.pop %v518
      %v520 = vadd.f32 %v519, 1.0
      %v521 = vrcp.pop %v520
      %v522 = vmul.f32 1.0, %v521
      %v523 = vadd.f32 %v304, %v472
      %v524 = vxor.u32 %v523, 2147483648
      %v525 = vmul.f32 %v524, 1.442695
      %v526 = vpow.pop %v525
      %v527 = vadd.f32 %v526, 1.0
      %v528 = vrcp.pop %v527
      %v529 = vmul.f32 1.0, %v528
      %v530 = vadd.f32 %v511, %v299
      %v531 = vmul.f32 %v522, %v530
      %v532 = vadd.f32 %v305, %v531
      %v533 = vtanh.pop %v532
      %v534 = vsub.f32 1.0, %v529
      %v535 = vmul.f32 %v534, %v533
      %v536 = vmul.f32 %v529, %v302
      %v537 = vadd.f32 %v535, %v536
      %p538 = scmp.lt.s32.totalorder %s301, 8
      %s539 = scalar_select %p538, 1, 0
      %v540 = vstv %s539
      %vm541 = vcmp.eq.s32.totalorder %v540, 1
      %v542 = vsel %vm541, %v537, %v302
      %s543 = scalar_lea.vmem %s250, 24
      %v544 = vld [vmem:[%s543] sm:$0xff]
      %v545 = vld [vmem:[%s543 + $0x8] sm:$0xff]
      %v546 = vld [vmem:[%s543 + $0x10] sm:$0xff]
      %v547 = vpack.c.bf16 %v542, %v542
      %548 = vmatprep.subr.bf16.mxu0 %v388
      %549 = vmatpush1.bf16.msra.mxu0 %v387
      %550 = vmatprep.subr.bf16.mxu0 %v391
      %551 = vmatpush1.bf16.msra.mxu0 %v390
      %552 = vmatprep.subr.bf16.mxu0 %v394
      %553 = vmatpush1.bf16.msra.mxu0 %v393
      %554 = vmatprep.subr.bf16.mxu0 %v397
      %555 = vmatpush1.bf16.msra.mxu0 %v396
      %556 = vmatprep.subr.bf16.mxu0 %v400
      %557 = vmatpush1.bf16.msra.mxu0 %v399
      %558 = vmatprep.subr.bf16.mxu0 %v403
      %559 = vmatpush1.bf16.msra.mxu0 %v402
      %560 = vmatprep.subr.bf16.mxu0 %v406
      %561 = vmatpush1.bf16.msra.mxu0 %v405
      %562 = vmatprep.subr.bf16.mxu0 %v409
      %563 = vmatpush1.bf16.msra.mxu0 %v408
      %564 = vmatprep.subr.bf16.mxu0 0
      %565 = vmatpush1.bf16.msra.mxu0 0
      %566 = vmatprep.subr.bf16.mxu0 0
      %567 = vmatpush1.bf16.msra.mxu0 0
      %568 = vmatprep.subr.bf16.mxu0 0
      %569 = vmatpush1.bf16.msra.mxu0 0
      %570 = vmatprep.subr.bf16.mxu0 0
      %571 = vmatpush1.bf16.msra.mxu0 0
      %572 = vmatprep.subr.bf16.mxu0 0
      %573 = vmatpush1.bf16.msra.mxu0 0
      %574 = vmatprep.subr.bf16.mxu0 0
      %575 = vmatpush1.bf16.msra.mxu0 0
      %576 = vmatprep.subr.bf16.mxu0 0
      %577 = vmatpush1.bf16.msra.mxu0 0
      %578 = vmatprep.subr.bf16.mxu0 0
      %579 = vmatpush1.bf16.msra.mxu0 0
      %580 = vmatprep.mubr.bf16.mxu0 0
      %581 = vmatmul.mubr.bf16.gmra.mrb[0].mxu0 %v547
      %v582 = vpop.f32.mrb[0].mxu0
      %v583 = vadd.f32 0.0, %v582
      %v584 = vpop.f32.mrb[0].mxu0
      %v585 = vadd.f32 0.0, %v584
      %v586 = vpop.f32.mrb[0].mxu0
      %v587 = vpop.f32.mrb[0].mxu0
      %588 = vdwg.mxu0
      %589 = vmatprep.subr.bf16.mxu0 0
      %590 = vmatpush1.bf16.msra.mxu0 %v389
      %591 = vmatprep.subr.bf16.mxu0 0
      %592 = vmatpush1.bf16.msra.mxu0 %v392
      %593 = vmatprep.subr.bf16.mxu0 0
      %594 = vmatpush1.bf16.msra.mxu0 %v395
      %595 = vmatprep.subr.bf16.mxu0 0
      %596 = vmatpush1.bf16.msra.mxu0 %v398
      %597 = vmatprep.subr.bf16.mxu0 0
      %598 = vmatpush1.bf16.msra.mxu0 %v401
      %599 = vmatprep.subr.bf16.mxu0 0
      %600 = vmatpush1.bf16.msra.mxu0 %v404
      %601 = vmatprep.subr.bf16.mxu0 0
      %602 = vmatpush1.bf16.msra.mxu0 %v407
      %603 = vmatprep.subr.bf16.mxu0 0
      %604 = vmatpush1.bf16.msra.mxu0 %v410
      %605 = vmatprep.subr.bf16.mxu0 0
      %606 = vmatpush1.bf16.msra.mxu0 0
      %607 = vmatprep.subr.bf16.mxu0 0
      %608 = vmatpush1.bf16.msra.mxu0 0
      %609 = vmatprep.subr.bf16.mxu0 0
      %610 = vmatpush1.bf16.msra.mxu0 0
      %611 = vmatprep.subr.bf16.mxu0 0
      %612 = vmatpush1.bf16.msra.mxu0 0
      %613 = vmatprep.subr.bf16.mxu0 0
      %614 = vmatpush1.bf16.msra.mxu0 0
      %615 = vmatprep.subr.bf16.mxu0 0
      %616 = vmatpush1.bf16.msra.mxu0 0
      %617 = vmatprep.subr.bf16.mxu0 0
      %618 = vmatpush1.bf16.msra.mxu0 0
      %619 = vmatprep.subr.bf16.mxu0 0
      %620 = vmatpush1.bf16.msra.mxu0 0
      %621 = vmatprep.mubr.bf16.mxu0 0
      %622 = vmatmul.mubr.bf16.gmra.mrb[0].mxu0 %v547
      %v623 = vpop.f32.mrb[0].mxu0
      %v624 = vadd.f32 0.0, %v623
      %v625 = vpop.f32.mrb[0].mxu0
      %v626 = vpop.f32.mrb[0].mxu0
      %v627 = vpop.f32.mrb[0].mxu0
      %628 = vdwg.mxu0
      %v629 = vadd.f32 %v544, %v583
      %v630 = vxor.u32 %v629, 2147483648
      %v631 = vmul.f32 %v630, 1.442695
      %v632 = vpow.pop %v631
      %v633 = vadd.f32 %v632, 1.0
      %v634 = vrcp.pop %v633
      %v635 = vmul.f32 1.0, %v634
      %v636 = vadd.f32 %v545, %v585
      %v637 = vxor.u32 %v636, 2147483648
      %v638 = vmul.f32 %v637, 1.442695
      %v639 = vpow.pop %v638
      %v640 = vadd.f32 %v639, 1.0
      %v641 = vrcp.pop %v640
      %v642 = vmul.f32 1.0, %v641
      %v643 = vadd.f32 %v624, %v299
      %v644 = vmul.f32 %v635, %v643
      %v645 = vadd.f32 %v546, %v644
      %v646 = vtanh.pop %v645
      %v647 = vsub.f32 1.0, %v642
      %v648 = vmul.f32 %v647, %v646
      %v649 = vmul.f32 %v642, %v542
      %v650 = vadd.f32 %v648, %v649
      %s651 = sadd.s32 %s301, 1
      %p652 = scmp.lt.s32.totalorder %s651, 8
      %s653 = scalar_select %p652, 1, 0
      %v654 = vstv %s653
      %vm655 = vcmp.eq.s32.totalorder %v654, 1
      %v656 = vsel %vm655, %v650, %v542
      %s657 = scalar_lea.vmem %s250, 48
      %v658 = vld [vmem:[%s657] sm:$0xff]
      %v659 = vld [vmem:[%s657 + $0x8] sm:$0xff]
      %v660 = vld [vmem:[%s657 + $0x10] sm:$0xff]
      %v661 = vpack.c.bf16 %v656, %v656
      %662 = vmatprep.subr.bf16.mxu0 %v388
      %663 = vmatpush1.bf16.msra.mxu0 %v387
      %664 = vmatprep.subr.bf16.mxu0 %v391
      %665 = vmatpush1.bf16.msra.mxu0 %v390
      %666 = vmatprep.subr.bf16.mxu0 %v394
      %667 = vmatpush1.bf16.msra.mxu0 %v393
      %668 = vmatprep.subr.bf16.mxu0 %v397
      %669 = vmatpush1.bf16.msra.mxu0 %v396
      %670 = vmatprep.subr.bf16.mxu0 %v400
      %671 = vmatpush1.bf16.msra.mxu0 %v399
      %672 = vmatprep.subr.bf16.mxu0 %v403
      %673 = vmatpush1.bf16.msra.mxu0 %v402
      %674 = vmatprep.subr.bf16.mxu0 %v406
      %675 = vmatpush1.bf16.msra.mxu0 %v405
      %676 = vmatprep.subr.bf16.mxu0 %v409
      %677 = vmatpush1.bf16.msra.mxu0 %v408
      %678 = vmatprep.subr.bf16.mxu0 0
      %679 = vmatpush1.bf16.msra.mxu0 0
      %680 = vmatprep.subr.bf16.mxu0 0
      %681 = vmatpush1.bf16.msra.mxu0 0
      %682 = vmatprep.subr.bf16.mxu0 0
      %683 = vmatpush1.bf16.msra.mxu0 0
      %684 = vmatprep.subr.bf16.mxu0 0
      %685 = vmatpush1.bf16.msra.mxu0 0
      %686 = vmatprep.subr.bf16.mxu0 0
      %687 = vmatpush1.bf16.msra.mxu0 0
      %688 = vmatprep.subr.bf16.mxu0 0
      %689 = vmatpush1.bf16.msra.mxu0 0
      %690 = vmatprep.subr.bf16.mxu0 0
      %691 = vmatpush1.bf16.msra.mxu0 0
      %692 = vmatprep.subr.bf16.mxu0 0
      %693 = vmatpush1.bf16.msra.mxu0 0
      %694 = vmatprep.mubr.bf16.mxu0 0
      %695 = vmatmul.mubr.bf16.gmra.mrb[0].mxu0 %v661
      %v696 = vpop.f32.mrb[0].mxu0
      %v697 = vadd.f32 0.0, %v696
      %v698 = vpop.f32.mrb[0].mxu0
      %v699 = vadd.f32 0.0, %v698
      %v700 = vpop.f32.mrb[0].mxu0
      %v701 = vpop.f32.mrb[0].mxu0
      %702 = vdwg.mxu0
      %703 = vmatprep.subr.bf16.mxu0 0
      %704 = vmatpush1.bf16.msra.mxu0 %v389
      %705 = vmatprep.subr.bf16.mxu0 0
      %706 = vmatpush1.bf16.msra.mxu0 %v392
      %707 = vmatprep.subr.bf16.mxu0 0
      %708 = vmatpush1.bf16.msra.mxu0 %v395
      %709 = vmatprep.subr.bf16.mxu0 0
      %710 = vmatpush1.bf16.msra.mxu0 %v398
      %711 = vmatprep.subr.bf16.mxu0 0
      %712 = vmatpush1.bf16.msra.mxu0 %v401
      %713 = vmatprep.subr.bf16.mxu0 0
      %714 = vmatpush1.bf16.msra.mxu0 %v404
      %715 = vmatprep.subr.bf16.mxu0 0
      %716 = vmatpush1.bf16.msra.mxu0 %v407
      %717 = vmatprep.subr.bf16.mxu0 0
      %718 = vmatpush1.bf16.msra.mxu0 %v410
      %719 = vmatprep.subr.bf16.mxu0 0
      %720 = vmatpush1.bf16.msra.mxu0 0
      %721 = vmatprep.subr.bf16.mxu0 0
      %722 = vmatpush1.bf16.msra.mxu0 0
      %723 = vmatprep.subr.bf16.mxu0 0
      %724 = vmatpush1.bf16.msra.mxu0 0
      %725 = vmatprep.subr.bf16.mxu0 0
      %726 = vmatpush1.bf16.msra.mxu0 0
      %727 = vmatprep.subr.bf16.mxu0 0
      %728 = vmatpush1.bf16.msra.mxu0 0
      %729 = vmatprep.subr.bf16.mxu0 0
      %730 = vmatpush1.bf16.msra.mxu0 0
      %731 = vmatprep.subr.bf16.mxu0 0
      %732 = vmatpush1.bf16.msra.mxu0 0
      %733 = vmatprep.subr.bf16.mxu0 0
      %734 = vmatpush1.bf16.msra.mxu0 0
      %735 = vmatprep.mubr.bf16.mxu0 0
      %736 = vmatmul.mubr.bf16.gmra.mrb[0].mxu0 %v661
      %v737 = vpop.f32.mrb[0].mxu0
      %v738 = vadd.f32 0.0, %v737
      %v739 = vpop.f32.mrb[0].mxu0
      %v740 = vpop.f32.mrb[0].mxu0
      %v741 = vpop.f32.mrb[0].mxu0
      %742 = vdwg.mxu0
      %v743 = vadd.f32 %v658, %v697
      %v744 = vxor.u32 %v743, 2147483648
      %v745 = vmul.f32 %v744, 1.442695
      %v746 = vpow.pop %v745
      %v747 = vadd.f32 %v746, 1.0
      %v748 = vrcp.pop %v747
      %v749 = vmul.f32 1.0, %v748
      %v750 = vadd.f32 %v659, %v699
      %v751 = vxor.u32 %v750, 2147483648
      %v752 = vmul.f32 %v751, 1.442695
      %v753 = vpow.pop %v752
      %v754 = vadd.f32 %v753, 1.0
      %v755 = vrcp.pop %v754
      %v756 = vmul.f32 1.0, %v755
      %v757 = vadd.f32 %v738, %v299
      %v758 = vmul.f32 %v749, %v757
      %v759 = vadd.f32 %v660, %v758
      %v760 = vtanh.pop %v759
      %v761 = vsub.f32 1.0, %v756
      %v762 = vmul.f32 %v761, %v760
      %v763 = vmul.f32 %v756, %v656
      %v764 = vadd.f32 %v762, %v763
      %s765 = sadd.s32 %s301, 2
      %p766 = scmp.lt.s32.totalorder %s765, 8
      %s767 = scalar_select %p766, 1, 0
      %v768 = vstv %s767
      %vm769 = vcmp.eq.s32.totalorder %v768, 1
      %v770 = vsel %vm769, %v764, %v656
      %s771 = scalar_lea.vmem %s250, 72
      %v772 = vld [vmem:[%s771] sm:$0xff]
      %v773 = vld [vmem:[%s771 + $0x8] sm:$0xff]
      %v774 = vld [vmem:[%s771 + $0x10] sm:$0xff]
      %v775 = vpack.c.bf16 %v770, %v770
      %776 = vmatprep.subr.bf16.mxu0 %v388
      %777 = vmatpush1.bf16.msra.mxu0 %v387
      %778 = vmatprep.subr.bf16.mxu0 %v391
      %779 = vmatpush1.bf16.msra.mxu0 %v390
      %780 = vmatprep.subr.bf16.mxu0 %v394
      %781 = vmatpush1.bf16.msra.mxu0 %v393
      %782 = vmatprep.subr.bf16.mxu0 %v397
      %783 = vmatpush1.bf16.msra.mxu0 %v396
      %784 = vmatprep.subr.bf16.mxu0 %v400
      %785 = vmatpush1.bf16.msra.mxu0 %v399
      %786 = vmatprep.subr.bf16.mxu0 %v403
      %787 = vmatpush1.bf16.msra.mxu0 %v402
      %788 = vmatprep.subr.bf16.mxu0 %v406
      %789 = vmatpush1.bf16.msra.mxu0 %v405
      %790 = vmatprep.subr.bf16.mxu0 %v409
      %791 = vmatpush1.bf16.msra.mxu0 %v408
      %792 = vmatprep.subr.bf16.mxu0 0
      %793 = vmatpush1.bf16.msra.mxu0 0
      %794 = vmatprep.subr.bf16.mxu0 0
      %795 = vmatpush1.bf16.msra.mxu0 0
      %796 = vmatprep.subr.bf16.mxu0 0
      %797 = vmatpush1.bf16.msra.mxu0 0
      %798 = vmatprep.subr.bf16.mxu0 0
      %799 = vmatpush1.bf16.msra.mxu0 0
      %800 = vmatprep.subr.bf16.mxu0 0
      %801 = vmatpush1.bf16.msra.mxu0 0
      %802 = vmatprep.subr.bf16.mxu0 0
      %803 = vmatpush1.bf16.msra.mxu0 0
      %804 = vmatprep.subr.bf16.mxu0 0
      %805 = vmatpush1.bf16.msra.mxu0 0
      %806 = vmatprep.subr.bf16.mxu0 0
      %807 = vmatpush1.bf16.msra.mxu0 0
      %808 = vmatprep.mubr.bf16.mxu0 0
      %809 = vmatmul.mubr.bf16.gmra.mrb[0].mxu0 %v775
      %v810 = vpop.f32.mrb[0].mxu0
      %v811 = vadd.f32 0.0, %v810
      %v812 = vpop.f32.mrb[0].mxu0
      %v813 = vadd.f32 0.0, %v812
      %v814 = vpop.f32.mrb[0].mxu0
      %v815 = vpop.f32.mrb[0].mxu0
      %816 = vdwg.mxu0
      %817 = vmatprep.subr.bf16.mxu0 0
      %818 = vmatpush1.bf16.msra.mxu0 %v389
      %819 = vmatprep.subr.bf16.mxu0 0
      %820 = vmatpush1.bf16.msra.mxu0 %v392
      %821 = vmatprep.subr.bf16.mxu0 0
      %822 = vmatpush1.bf16.msra.mxu0 %v395
      %823 = vmatprep.subr.bf16.mxu0 0
      %824 = vmatpush1.bf16.msra.mxu0 %v398
      %825 = vmatprep.subr.bf16.mxu0 0
      %826 = vmatpush1.bf16.msra.mxu0 %v401
      %827 = vmatprep.subr.bf16.mxu0 0
      %828 = vmatpush1.bf16.msra.mxu0 %v404
      %829 = vmatprep.subr.bf16.mxu0 0
      %830 = vmatpush1.bf16.msra.mxu0 %v407
      %831 = vmatprep.subr.bf16.mxu0 0
      %832 = vmatpush1.bf16.msra.mxu0 %v410
      %833 = vmatprep.subr.bf16.mxu0 0
      %834 = vmatpush1.bf16.msra.mxu0 0
      %835 = vmatprep.subr.bf16.mxu0 0
      %836 = vmatpush1.bf16.msra.mxu0 0
      %837 = vmatprep.subr.bf16.mxu0 0
      %838 = vmatpush1.bf16.msra.mxu0 0
      %839 = vmatprep.subr.bf16.mxu0 0
      %840 = vmatpush1.bf16.msra.mxu0 0
      %841 = vmatprep.subr.bf16.mxu0 0
      %842 = vmatpush1.bf16.msra.mxu0 0
      %843 = vmatprep.subr.bf16.mxu0 0
      %844 = vmatpush1.bf16.msra.mxu0 0
      %845 = vmatprep.subr.bf16.mxu0 0
      %846 = vmatpush1.bf16.msra.mxu0 0
      %847 = vmatprep.subr.bf16.mxu0 0
      %848 = vmatpush1.bf16.msra.mxu0 0
      %849 = vmatprep.mubr.bf16.mxu0 0
      %850 = vmatmul.mubr.bf16.gmra.mrb[0].mxu0 %v775
      %v851 = vpop.f32.mrb[0].mxu0
      %v852 = vadd.f32 0.0, %v851
      %v853 = vpop.f32.mrb[0].mxu0
      %v854 = vpop.f32.mrb[0].mxu0
      %v855 = vpop.f32.mrb[0].mxu0
      %856 = vdwg.mxu0
      %v857 = vadd.f32 %v772, %v811
      %v858 = vxor.u32 %v857, 2147483648
      %v859 = vmul.f32 %v858, 1.442695
      %v860 = vpow.pop %v859
      %v861 = vadd.f32 %v860, 1.0
      %v862 = vrcp.pop %v861
      %v863 = vmul.f32 1.0, %v862
      %v864 = vadd.f32 %v773, %v813
      %v865 = vxor.u32 %v864, 2147483648
      %v866 = vmul.f32 %v865, 1.442695
      %v867 = vpow.pop %v866
      %v868 = vadd.f32 %v867, 1.0
      %v869 = vrcp.pop %v868
      %v870 = vmul.f32 1.0, %v869
      %v871 = vadd.f32 %v852, %v299
      %v872 = vmul.f32 %v863, %v871
      %v873 = vadd.f32 %v774, %v872
      %v874 = vtanh.pop %v873
      %v875 = vsub.f32 1.0, %v870
      %v876 = vmul.f32 %v875, %v874
      %v877 = vmul.f32 %v870, %v770
      %v878 = vadd.f32 %v876, %v877
      %s879 = sadd.s32 %s301, 3
      %p880 = scmp.lt.s32.totalorder %s879, 8
      %s881 = scalar_select %p880, 1, 0
      %v882 = vstv %s881
      %vm883 = vcmp.eq.s32.totalorder %v882, 1
      %v884 = vsel %vm883, %v878, %v770
      %885 = vst [vmem:[#allocation2] sm:$0xff] %v884
      %p886 = scmp.eq.s32.totalorder %s23, 1
      // Predicated region
      $region45: #{regression_rnn_forward.1} parent=39 // pred_check
        %p887 = pneg %p886
      $region46: #{regression_rnn_forward.1} parent=39 // pred_check_branch
        %889 = sbr.rel (%p887) target = $region48
      $region47: #{regression_rnn_forward.1} parent=39 // pred_region
        %v890 = vld [vmem:[%s3] sm:$0x1]
        %v892 = vlaneseq
        %v893 = vshrl.u32 %v892, 7
        %v894 = vsub.s32 0, %v893
        %v895 = vrot.slane %v890, %v894
        %v897 = vmul.f32 %v884, %v895
        %898 = vadd.xlane.f32.xlu0 %v897
        %v899 = vpop.xlane.xlu0 %898
        %v900 = vld [vmem:[#allocation3] sm:$0x1]
        %v902 = vlaneseq
        %v903 = vshrl.u32 %v902, 7
        %v904 = vsub.s32 0, %v903
        %v905 = vrot.slane %v900, %v904
        %v907 = vadd.f32 %v899, %v905
        %vm908 = vcmask 7168
        %909 = vst.msk [vmem:[%s255] sm:$0xff] %vm908, %v907
      $region48: #{regression_rnn_forward.1} parent=39 // pred_fallthru
        _
      %p910 = scmp.lt.s32.totalorder %s22, 0
      %s911 = scalar_select %p910, %s22, 0
      %s912 = smul.addr %s911, 8
      %s913 = scalar_lea.vmem %s5, %s912
      // Predicated region
      $region49: #{regression_rnn_forward.1} parent=39 // pred_check
        %p914 = pneg %p160
      $region50: #{regression_rnn_forward.1} parent=39 // pred_check_branch
        %916 = sbr.rel (%p914) target = $region52
      $region51: #{regression_rnn_forward.1} parent=39 // pred_region
        _
      $region52: #{regression_rnn_forward.1} parent=39 // pred_fallthru
        _
      // Predicated region
      $region53: #{regression_rnn_forward.1} parent=39 // pred_check
        %p917 = pneg %p160
      $region54: #{regression_rnn_forward.1} parent=39 // pred_check_branch
        %919 = sbr.rel (%p917) target = $region56
      $region55: #{regression_rnn_forward.1} parent=39 // pred_region
        %p920 = scmp.lt.s32.totalorder %s22, 0
        %s921 = scalar_select %p920, %s22, 0
        %s922 = smul.addr %s921, 8
        %s923 = scalar_lea.vmem %s5, %s922
      $region56: #{regression_rnn_forward.1} parent=39 // pred_fallthru
        _
    $region40: #{regression_rnn_forward.1} parent=5 // pred_fallthru
      _
    %p924 = scmp.le.s32.totalorder 2, %s13
    // Predicated region
    $region57: #{regression_rnn_forward.1} parent=5 // pred_check
      %p925 = pneg %p924
    $region58: #{regression_rnn_forward.1} parent=5 // pred_check_branch
      %927 = sbr.rel (%p925) target = $region60
    $region59: #{regression_rnn_forward.1} parent=5 // pred_region
      %s928 = ssub.s32 %s13, 2
    $region60: #{regression_rnn_forward.1} parent=5 // pred_fallthru
      _
  $region6: #{regression_rnn_forward.1} parent=0 // loop_footer
    %s17 = sadd.s32 1, %s13
  $region7: #{regression_rnn_forward.1} parent=0 // loop_footer_branch
    %12 = sbr.rel target = $region3
  $region8: #{regression_rnn_forward.1} parent=0 // loop_exit
    _

</llo_original>
